<compile_context>
chip_gen: v5e
topology: v5e:2x2
jax: 0.10.0
libtpu: 0.0.40
codegen_flags: <defaults>
</compile_context>

<pallas_src>
import functools

import numpy as np

import jax
import jax.numpy as jnp
from jax import lax
from jax.experimental import pallas as pl
from jax.experimental.pallas import tpu as pltpu

_LANE = 128


def _vmem_capacity_bytes():
    try:
        return int(pltpu.get_tpu_info().vmem_capacity_bytes)
    except Exception:
        return 64 * 1024 * 1024  # v7x per-TensorCore VMEM (most restrictive gen)


def _sublane_rows(rows, dtype):
    """Rows padded to the minimal sublane tile for this dtype (packing-aware)."""
    itemsize = np.dtype(dtype).itemsize
    packing = max(1, 4 // itemsize)       # values packed per 32-bit sublane
    sub_tile = 8 * packing
    return ((rows + sub_tile - 1) // sub_tile) * sub_tile


def _block_bytes(rows, cols, dtype):
    """Actual VMEM footprint of a (rows, cols) block (sublane + lane padding)."""
    cols_pad = ((cols + _LANE - 1) // _LANE) * _LANE
    return _sublane_rows(rows, dtype) * cols_pad * np.dtype(dtype).itemsize


def _pick_tk(B, D, dtypes, max_tk=None):
    """Feature-tile width: as large as double-buffered VMEM allows."""
    cap = _vmem_capacity_bytes()
    # ~70% of VMEM for double-buffered input blocks; the rest covers the
    # (double-buffered) (B, B) Gram output blocks and compiler scratch.
    out_bytes = 2 * len(dtypes) * _block_bytes(B, B, jnp.float32)
    budget = max(int(cap * 0.70) - out_bytes, 2 * 1024 * 1024)
    # Bytes consumed per output lane of tk across all streams, x2 for
    # double-buffering, using the *padded* sublane count (B=2 pads to 8/16).
    bytes_per_lane = sum(
        2 * _sublane_rows(B, dt) * np.dtype(dt).itemsize for dt in dtypes)
    tk = (budget // bytes_per_lane) // _LANE * _LANE
    tk = max(tk, _LANE)
    if max_tk is not None:
        tk = max(_LANE, min(tk, (max_tk // _LANE) * _LANE))
    if tk >= D:
        return D                           # whole feature axis, one block
    # Prefer a tile width that divides D exactly -> no ragged last tile.
    if D % _LANE == 0 and D % tk != 0:
        t = tk
        while t >= max(_LANE, tk // 2):
            if D % t == 0:
                return t
            t -= _LANE
    return tk


def _gram_kernel(*refs, n_streams, D, tk, tiles_per_par, accumulate, needs_mask):
    """Per-tile partial Gram(s): g = x_tile @ x_tile^T, f32 accumulation."""
    x_refs = refs[:n_streams]
    g_refs = refs[n_streams:]

    if accumulate:
        p, k = pl.program_id(0), pl.program_id(1)
        tile = p * tiles_per_par + k

        @pl.when(k == 0)
        def _():
            for g_ref in g_refs:
                g_ref[...] = jnp.zeros_like(g_ref)
    else:
        tile = pl.program_id(0)

    xs = tuple(x_ref[...] for x_ref in x_refs)

    if needs_mask:
        start = tile * tk

        def _mask_tail(vals):
            col = lax.broadcasted_iota(jnp.int32, vals[0].shape, 1) + start
            keep = col < D
            return tuple(jnp.where(keep, v, jnp.zeros_like(v)) for v in vals)

        # Only the ragged / padded tail tile pays for the iota+select; all
        # interior steps stay pure DMA + MXU.
        xs = lax.cond(start + tk > D, _mask_tail, lambda vals: vals, xs)

    for x, g_ref in zip(xs, g_refs):
        # Contract over the feature (lane) axis: X @ X^T with f32 MXU acc.
        g = lax.dot_general(
            x, x,
            dimension_numbers=(((1,), (1,)), ((), ())),
            preferred_element_type=jnp.float32,
        )
        if accumulate:
            g_ref[0] += g
        else:
            g_ref[0] = g


def _grams(xs, *, max_tk=None, accumulate=None):
    """Gram matrices X @ X^T (f32) for each (B, D) array in xs.

    All arrays share (B, D) and are streamed through a single fused
    pallas_call (one grid, one pipeline, one HBM pass per input)."""
    B, D = xs[0].shape
    assert all(x.shape == (B, D) for x in xs)
    n = len(xs)
    dtypes = [x.dtype for x in xs]

    tk = _pick_tk(B, D, dtypes, max_tk=max_tk)
    num_tiles = (D + tk - 1) // tk

    if accumulate is None:
        # Carry a resident VMEM accumulator only when the partial-Gram
        # writeback (num_tiles * B * B * 4 bytes per stream) would be material.
        accumulate = num_tiles > 2 and num_tiles * B * B * 4 > (4 << 20)

    if accumulate:
        n_par = min(2, num_tiles)              # one partial Gram per v7x TC
        tiles_per_par = (num_tiles + n_par - 1) // n_par
        grid = (n_par, tiles_per_par)
        total_tiles = n_par * tiles_per_par
        lead = n_par
        last_tile = num_tiles - 1

        def in_map(p, k):
            return (0, jnp.minimum(p * tiles_per_par + k, last_tile))

        def out_map(p, k):
            return (p, 0, 0)

        dims = ("parallel", "arbitrary")
    else:
        tiles_per_par = num_tiles              # unused in this mode
        grid = (num_tiles,)
        total_tiles = num_tiles
        lead = num_tiles

        def in_map(k):
            return (0, k)

        def out_map(k):
            return (k, 0, 0)

        dims = ("parallel",)

    needs_mask = total_tiles * tk != D

    in_specs = [pl.BlockSpec((B, tk), in_map) for _ in xs]
    out_specs = [pl.BlockSpec((1, B, B), out_map) for _ in xs]
    out_shape = tuple(jax.ShapeDtypeStruct((lead, B, B), jnp.float32) for _ in xs)

    # Raise the scoped-VMEM limit so big tiles keep full double-buffering on
    # v5e/v6e (16/32 MiB defaults) while staying inside v7x's 64 MiB.
    cap = _vmem_capacity_bytes()
    needed = (sum(2 * _block_bytes(B, tk, dt) for dt in dtypes)
              + 2 * n * _block_bytes(B, B, jnp.float32) + (2 << 20))
    vmem_limit = int(min(0.9 * cap, max(needed + (8 << 20), 32 << 20)))

    kernel = functools.partial(
        _gram_kernel, n_streams=n, D=D, tk=tk, tiles_per_par=tiles_per_par,
        accumulate=accumulate, needs_mask=needs_mask)

    outs = pl.pallas_call(
        kernel,
        out_shape=out_shape,
        grid_spec=pltpu.PrefetchScalarGridSpec(
            num_scalar_prefetch=0,
            grid=grid,
            in_specs=in_specs,
            out_specs=out_specs,
        ),
        compiler_params=pltpu.CompilerParams(
            dimension_semantics=dims,
            vmem_limit_bytes=vmem_limit,
        ),
    )(*xs)
    if not isinstance(outs, (tuple, list)):
        outs = (outs,)
    return [jnp.sum(o, axis=0) for o in outs]


def _normalized_gram(g, eps=1e-6):
    """Batch-mean centering + per-row L2 normalization, applied on the Gram.

    Xc = C X, C = I - 11^T/B   =>  Xc Xc^T = C G C
    Xn = Xc / (||Xc||_row+eps) =>  Xn Xn^T = (C G C) / outer(n+eps, n+eps)
    """
    row_mean = jnp.mean(g, axis=1, keepdims=True)
    col_mean = jnp.mean(g, axis=0, keepdims=True)
    tot_mean = jnp.mean(g)
    gc = g - row_mean - col_mean + tot_mean
    diag = jnp.maximum(jnp.diagonal(gc), 0.0)   # guard tiny negative rounding
    nrm = jnp.sqrt(diag) + eps
    return gc / (nrm[:, None] * nrm[None, :])


def _as_2d(x):
    B = x.shape[0]
    x = x.reshape(B, -1)
    if x.dtype not in (jnp.float32, jnp.bfloat16):
        x = x.astype(jnp.float32)   # ints / f64 / f16 -> f32; bf16/f32 stream natively
    return x


def orthogo_diff_loss(input1, input2, *, max_tk=None, accumulate=None):
    """Forward pass of OrthogoDiffLoss (mean((X1n^T X2n)^2))."""
    x1 = _as_2d(input1)
    x2 = _as_2d(input2)
    D1, D2 = x1.shape[1], x2.shape[1]

    if D1 == D2:
        g1, g2 = _grams([x1, x2], max_tk=max_tk, accumulate=accumulate)
    else:
        (g1,) = _grams([x1], max_tk=max_tk, accumulate=accumulate)
        (g2,) = _grams([x2], max_tk=max_tk, accumulate=accumulate)

    g1n = _normalized_gram(g1)
    g2n = _normalized_gram(g2)
    # sum((X1n^T X2n)^2) = trace(X1n X1n^T X2n X2n^T) = sum(G1n * G2n)
    return jnp.sum(g1n * g2n) / jnp.float32(D1 * D2)


def _reference(input1, input2):
    B = input1.shape[0]
    x1 = input1.reshape(B, -1).astype(jnp.float32)
    x2 = input2.reshape(B, -1).astype(jnp.float32)
    x1 = x1 - jnp.mean(x1, axis=0, keepdims=True)
    x2 = x2 - jnp.mean(x2, axis=0, keepdims=True)
    x1 = x1 / (jnp.linalg.norm(x1, axis=1, keepdims=True) + 1e-6)
    x2 = x2 / (jnp.linalg.norm(x2, axis=1, keepdims=True) + 1e-6)
    return jnp.mean((x1.T @ x2) ** 2)


if __name__ == "__main__":
    key = jax.random.PRNGKey(0)
    k1, k2, k3, k4 = jax.random.split(key, 4)

    # Shapes consistent with the module: batch=2, channels=4, spatial=16.
    input1 = jax.random.normal(k1, (2, 4, 16, 16), dtype=jnp.float32)
    input2 = jax.random.normal(k2, (2, 4, 16, 16), dtype=jnp.float32)

    loss = jax.block_until_ready(jax.jit(orthogo_diff_loss)(input1, input2))
    ref = _reference(input1, input2)
    assert jnp.isfinite(loss), "non-finite loss"
    assert jnp.allclose(loss, ref, rtol=2e-3, atol=1e-9), (loss, ref)

    # bf16 inputs stream natively (no wrapper upcast); f32 MXU accumulation.
    l_bf16 = jax.block_until_ready(
        jax.jit(orthogo_diff_loss)(input1.astype(jnp.bfloat16),
                                   input2.astype(jnp.bfloat16)))
    r_bf16 = _reference(input1.astype(jnp.bfloat16), input2.astype(jnp.bfloat16))
    assert jnp.allclose(l_bf16, r_bf16, rtol=1e-2, atol=1e-9), (l_bf16, r_bf16)

    # Multi-tile + ragged last tile (D = 500, forced 128-wide tiles):
    # exercises the lax.cond-gated tail mask on the 'parallel' partial path.
    a = jax.random.normal(k3, (2, 5, 10, 10), dtype=jnp.float32)
    b = jax.random.normal(k4, (2, 5, 10, 10), dtype=jnp.float32)
    l_rag = jax.block_until_ready(
        jax.jit(functools.partial(orthogo_diff_loss, max_tk=128))(a, b))
    r_rag = _reference(a, b)
    assert jnp.allclose(l_rag, r_rag, rtol=2e-3, atol=1e-9), (l_rag, r_rag)

    # Resident-VMEM accumulator path (leading 2-way 'parallel' axis +
    # 'arbitrary' reduction axis), including the ragged tail tile.
    l_acc = jax.block_until_ready(
        jax.jit(functools.partial(orthogo_diff_loss, max_tk=128,
                                  accumulate=True))(a, b))
    assert jnp.allclose(l_acc, r_rag, rtol=2e-3, atol=1e-9), (l_acc, r_rag)

    # Mismatched feature dims fall back to one streaming call per input.
    c = jax.random.normal(k3, (2, 4, 8, 16), dtype=jnp.float32)
    l_mix = jax.block_until_ready(jax.jit(orthogo_diff_loss)(input1, c))
    r_mix = _reference(input1, c)
    assert jnp.allclose(l_mix, r_mix, rtol=2e-3, atol=1e-9), (l_mix, r_mix)

    print("KERNEL_OK")
</pallas_src>

<mosaic_0001>
module attributes {stable_mosaic.version = 11 : i64} {
  func.func @_gram_kernel(%arg0: i32, %arg1: memref<2x1024xf32, #tpu.memory_space<vmem>>, %arg2: memref<2x1024xf32, #tpu.memory_space<vmem>>, %arg3: memref<1x2x2xf32, #tpu.memory_space<vmem>>, %arg4: memref<1x2x2xf32, #tpu.memory_space<vmem>>) attributes {dimension_semantics = [#tpu.dimension_semantics<parallel>], iteration_bounds = array<i64: 1>, scalar_prefetch = 0 : i64, scratch_operands = 0 : i64, tpu.core_type = #tpu.core_type<tc>, window_params = [{transform_indices = @transform_0, window_bounds = array<i64: 2, 1024>}, {transform_indices = @transform_1, window_bounds = array<i64: 2, 1024>}, {transform_indices = @transform_2, window_bounds = array<i64: 1, 2, 2>}, {transform_indices = @transform_3, window_bounds = array<i64: 1, 2, 2>}]} {
    %c0 = arith.constant 0 : index
    %c0_0 = arith.constant 0 : index
    %0 = vector.load %arg1[%c0, %c0_0] : memref<2x1024xf32, #tpu.memory_space<vmem>>, vector<2x1024xf32>
    %c0_1 = arith.constant 0 : index
    %c0_2 = arith.constant 0 : index
    %1 = vector.load %arg2[%c0_1, %c0_2] : memref<2x1024xf32, #tpu.memory_space<vmem>>, vector<2x1024xf32>
    %cst = arith.constant dense<0.000000e+00> : vector<2x2xf32>
    %2 = tpu.matmul %0, %0, %cst {dimension_numbers = #tpu.dot_dimension_numbers<[1], [1], [0], [0], [0, 0, 1, 0], [], []>} : vector<2x1024xf32>, vector<2x1024xf32>, vector<2x2xf32> -> vector<2x2xf32>
    %c0_3 = arith.constant 0 : index
    %c0_4 = arith.constant 0 : index
    %c0_5 = arith.constant 0 : index
    %3 = vector.load %arg3[%c0_3, %c0_4, %c0_5] : memref<1x2x2xf32, #tpu.memory_space<vmem>>, vector<1x2x2xf32>
    %4 = vector.shape_cast %3 : vector<1x2x2xf32> to vector<2x2xf32>
    %5 = vector.shape_cast %2 : vector<2x2xf32> to vector<1x2x2xf32>
    tpu.vector_store %arg3[%c0_3, %c0_4, %c0_5], %5 {strides = array<i32>} : memref<1x2x2xf32, #tpu.memory_space<vmem>>, vector<1x2x2xf32>,
    %cst_6 = arith.constant dense<0.000000e+00> : vector<2x2xf32>
    %6 = tpu.matmul %1, %1, %cst_6 {dimension_numbers = #tpu.dot_dimension_numbers<[1], [1], [0], [0], [0, 0, 1, 0], [], []>} : vector<2x1024xf32>, vector<2x1024xf32>, vector<2x2xf32> -> vector<2x2xf32>
    %c0_7 = arith.constant 0 : index
    %c0_8 = arith.constant 0 : index
    %c0_9 = arith.constant 0 : index
    %7 = vector.load %arg4[%c0_7, %c0_8, %c0_9] : memref<1x2x2xf32, #tpu.memory_space<vmem>>, vector<1x2x2xf32>
    %8 = vector.shape_cast %7 : vector<1x2x2xf32> to vector<2x2xf32>
    %9 = vector.shape_cast %6 : vector<2x2xf32> to vector<1x2x2xf32>
    tpu.vector_store %arg4[%c0_7, %c0_8, %c0_9], %9 {strides = array<i32>} : memref<1x2x2xf32, #tpu.memory_space<vmem>>, vector<1x2x2xf32>,
    return
  }
  func.func @transform_0(%arg0: i32) -> (i32, i32) {
    %c0_i32 = arith.constant 0 : i32
    %c0_i32_0 = arith.constant 0 : i32
    return %c0_i32, %arg0 : i32, i32
  }
  func.func @transform_1(%arg0: i32) -> (i32, i32) {
    %c0_i32 = arith.constant 0 : i32
    %c0_i32_0 = arith.constant 0 : i32
    return %c0_i32, %arg0 : i32, i32
  }
  func.func @transform_2(%arg0: i32) -> (i32, i32, i32) {
    %c0_i32 = arith.constant 0 : i32
    %c0_i32_0 = arith.constant 0 : i32
    %c0_i32_1 = arith.constant 0 : i32
    return %arg0, %c0_i32, %c0_i32_0 : i32, i32, i32
  }
  func.func @transform_3(%arg0: i32) -> (i32, i32, i32) {
    %c0_i32 = arith.constant 0 : i32
    %c0_i32_0 = arith.constant 0 : i32
    %c0_i32_1 = arith.constant 0 : i32
    return %arg0, %c0_i32, %c0_i32_0 : i32, i32, i32
  }
}

</mosaic_0001>

<llo_original>
// kernel: orthogo_diff_loss.1
$region0: #{orthogo_diff_loss.1}
  #allocation0 [shape = 'u32[]', space=smem, size = 0x4, offset = 0x4, fixed_abs, tag = 'smem constant byte address 0x4 - core index']
  #allocation1 [shape = 'u32[72,128]{1,0:T(1,128)}', space=vmem, size = 0x9000, scoped, tag = 'internal scratch']
  %s0 = inlined_call_operand.vmem [shape: f32[2,1024], index: 0, kind: input, shape index: {}]
  %s1 = inlined_call_operand.vmem [shape: f32[2,1024], index: 1, kind: input, shape index: {}]
  %s2 = inlined_call_operand.vmem [shape: f32[1,2,2], index: 2, kind: output, shape index: {0}]
  %s3 = inlined_call_operand.vmem [shape: f32[1,2,2], index: 3, kind: output, shape index: {1}]
  %4 = xla_tuple %s2, %s3
  %s5 = sld [smem:[#allocation0]]
  $region26: #{orthogo_diff_loss.1} parent=0
    _
  %s7 = ssub.s32 1, %s5
  %s8 = scalar_select 0, %s7, %s5
  // Predicated region
  $region2: #{orthogo_diff_loss.1} parent=0 // pred_check
    _
  $region3: #{orthogo_diff_loss.1} parent=0 // pred_check_branch
    %10 = sbr.rel (0) target = $region5
  $region4: #{orthogo_diff_loss.1} parent=0 // pred_region
    _
  $region5: #{orthogo_diff_loss.1} parent=0 // pred_fallthru
    _
  // Predicated region
  $region6: #{orthogo_diff_loss.1} parent=0 // pred_check
    _
  $region7: #{orthogo_diff_loss.1} parent=0 // pred_check_branch
    %12 = sbr.rel (0) target = $region9
  $region8: #{orthogo_diff_loss.1} parent=0 // pred_region
    _
  $region9: #{orthogo_diff_loss.1} parent=0 // pred_fallthru
    _
  %v13 = vld [vmem:[%s0] sm:$0xff]
  %v14 = vld [vmem:[%s0 + $0x8] sm:$0xff]
  %v15 = vld [vmem:[%s1] sm:$0xff]
  %v16 = vld [vmem:[%s1 + $0x8] sm:$0xff]
  %19 = vst [vmem:[#allocation1] ss:$4 sm:$0xff] %v13
  %s20 = scalar_lea.vmem [#allocation1], 32
  %21 = vst [vmem:[%s20] ss:$4 sm:$0xff] %v14
  %v22 = vld.sshfl [vmem:[#allocation1] sm:$0xff pattern:$0x73625140]
  %v23 = vld.sshfl [vmem:[#allocation1 + $0x8] sm:$0xff pattern:$0x73625140]
  %v24 = vld.sshfl [vmem:[#allocation1 + $0x10] sm:$0xff pattern:$0x73625140]
  %v25 = vld.sshfl [vmem:[#allocation1 + $0x18] sm:$0xff pattern:$0x73625140]
  %v26 = vld.sshfl [vmem:[#allocation1 + $0x20] sm:$0xff pattern:$0x73625140]
  %v27 = vld.sshfl [vmem:[#allocation1 + $0x28] sm:$0xff pattern:$0x73625140]
  %v28 = vld.sshfl [vmem:[#allocation1 + $0x30] sm:$0xff pattern:$0x73625140]
  %v29 = vld.sshfl [vmem:[#allocation1 + $0x38] sm:$0xff pattern:$0x73625140]
  %38 = vst [vmem:[#allocation1] ss:$4 sm:$0xff] %v13
  %s39 = scalar_lea.vmem [#allocation1], 32
  %40 = vst [vmem:[%s39] ss:$4 sm:$0xff] %v14
  %v41 = vld.sshfl [vmem:[#allocation1] sm:$0xff pattern:$0x73625140]
  %v42 = vld.sshfl [vmem:[#allocation1 + $0x8] sm:$0xff pattern:$0x73625140]
  %v43 = vld.sshfl [vmem:[#allocation1 + $0x10] sm:$0xff pattern:$0x73625140]
  %v44 = vld.sshfl [vmem:[#allocation1 + $0x18] sm:$0xff pattern:$0x73625140]
  %v45 = vld.sshfl [vmem:[#allocation1 + $0x20] sm:$0xff pattern:$0x73625140]
  %v46 = vld.sshfl [vmem:[#allocation1 + $0x28] sm:$0xff pattern:$0x73625140]
  %v47 = vld.sshfl [vmem:[#allocation1 + $0x30] sm:$0xff pattern:$0x73625140]
  %v48 = vld.sshfl [vmem:[#allocation1 + $0x38] sm:$0xff pattern:$0x73625140]
  %57 = vmatpush.xpose.msra.mxu0 0.0
  %58 = vmatpush.xpose.msra.mxu0 0.0
  %59 = vmatpush.xpose.msra.mxu0 0.0
  %60 = vmatpush.xpose.msra.mxu0 0.0
  %61 = vmatpush.xpose.msra.mxu0 0.0
  %62 = vmatpush.xpose.msra.mxu0 0.0
  %63 = vmatpush.xpose.msra.mxu0 0.0
  %64 = vmatpush.xpose.msra.mxu0 0.0
  %65 = vmatpush.xpose.msra.mxu0 0.0
  %66 = vmatpush.xpose.msra.mxu0 0.0
  %67 = vmatpush.xpose.msra.mxu0 0.0
  %68 = vmatpush.xpose.msra.mxu0 0.0
  %69 = vmatpush.xpose.msra.mxu0 0.0
  %70 = vmatpush.xpose.msra.mxu0 0.0
  %71 = vmatpush.xpose.msra.mxu0 0.0
  %72 = vmatpush.xpose.msra.mxu0 %v41
  %73 = vmatmul.f32.gmra.mxu0 %v22
  %v74 = vpop.f32.mrf.mxu0
  %v75 = vadd.f32 0.0, %v74
  %76 = vdwg.mxu0
  %77 = vmatpush.xpose.msra.mxu0 0.0
  %78 = vmatpush.xpose.msra.mxu0 0.0
  %79 = vmatpush.xpose.msra.mxu0 0.0
  %80 = vmatpush.xpose.msra.mxu0 0.0
  %81 = vmatpush.xpose.msra.mxu0 0.0
  %82 = vmatpush.xpose.msra.mxu0 0.0
  %83 = vmatpush.xpose.msra.mxu0 0.0
  %84 = vmatpush.xpose.msra.mxu0 0.0
  %85 = vmatpush.xpose.msra.mxu0 0.0
  %86 = vmatpush.xpose.msra.mxu0 0.0
  %87 = vmatpush.xpose.msra.mxu0 0.0
  %88 = vmatpush.xpose.msra.mxu0 0.0
  %89 = vmatpush.xpose.msra.mxu0 0.0
  %90 = vmatpush.xpose.msra.mxu0 0.0
  %91 = vmatpush.xpose.msra.mxu0 0.0
  %92 = vmatpush.xpose.msra.mxu0 %v42
  %93 = vmatmul.f32.gmra.mxu0 %v23
  %v94 = vpop.f32.mrf.mxu0
  %v95 = vadd.f32 %v75, %v94
  %96 = vdwg.mxu0
  %97 = vmatpush.xpose.msra.mxu0 0.0
  %98 = vmatpush.xpose.msra.mxu0 0.0
  %99 = vmatpush.xpose.msra.mxu0 0.0
  %100 = vmatpush.xpose.msra.mxu0 0.0
  %101 = vmatpush.xpose.msra.mxu0 0.0
  %102 = vmatpush.xpose.msra.mxu0 0.0
  %103 = vmatpush.xpose.msra.mxu0 0.0
  %104 = vmatpush.xpose.msra.mxu0 0.0
  %105 = vmatpush.xpose.msra.mxu0 0.0
  %106 = vmatpush.xpose.msra.mxu0 0.0
  %107 = vmatpush.xpose.msra.mxu0 0.0
  %108 = vmatpush.xpose.msra.mxu0 0.0
  %109 = vmatpush.xpose.msra.mxu0 0.0
  %110 = vmatpush.xpose.msra.mxu0 0.0
  %111 = vmatpush.xpose.msra.mxu0 0.0
  %112 = vmatpush.xpose.msra.mxu0 %v43
  %113 = vmatmul.f32.gmra.mxu0 %v24
  %v114 = vpop.f32.mrf.mxu0
  %v115 = vadd.f32 %v95, %v114
  %116 = vdwg.mxu0
  %117 = vmatpush.xpose.msra.mxu0 0.0
  %118 = vmatpush.xpose.msra.mxu0 0.0
  %119 = vmatpush.xpose.msra.mxu0 0.0
  %120 = vmatpush.xpose.msra.mxu0 0.0
  %121 = vmatpush.xpose.msra.mxu0 0.0
  %122 = vmatpush.xpose.msra.mxu0 0.0
  %123 = vmatpush.xpose.msra.mxu0 0.0
  %124 = vmatpush.xpose.msra.mxu0 0.0
  %125 = vmatpush.xpose.msra.mxu0 0.0
  %126 = vmatpush.xpose.msra.mxu0 0.0
  %127 = vmatpush.xpose.msra.mxu0 0.0
  %128 = vmatpush.xpose.msra.mxu0 0.0
  %129 = vmatpush.xpose.msra.mxu0 0.0
  %130 = vmatpush.xpose.msra.mxu0 0.0
  %131 = vmatpush.xpose.msra.mxu0 0.0
  %132 = vmatpush.xpose.msra.mxu0 %v44
  %133 = vmatmul.f32.gmra.mxu0 %v25
  %v134 = vpop.f32.mrf.mxu0
  %v135 = vadd.f32 %v115, %v134
  %136 = vdwg.mxu0
  %137 = vmatpush.xpose.msra.mxu0 0.0
  %138 = vmatpush.xpose.msra.mxu0 0.0
  %139 = vmatpush.xpose.msra.mxu0 0.0
  %140 = vmatpush.xpose.msra.mxu0 0.0
  %141 = vmatpush.xpose.msra.mxu0 0.0
  %142 = vmatpush.xpose.msra.mxu0 0.0
  %143 = vmatpush.xpose.msra.mxu0 0.0
  %144 = vmatpush.xpose.msra.mxu0 0.0
  %145 = vmatpush.xpose.msra.mxu0 0.0
  %146 = vmatpush.xpose.msra.mxu0 0.0
  %147 = vmatpush.xpose.msra.mxu0 0.0
  %148 = vmatpush.xpose.msra.mxu0 0.0
  %149 = vmatpush.xpose.msra.mxu0 0.0
  %150 = vmatpush.xpose.msra.mxu0 0.0
  %151 = vmatpush.xpose.msra.mxu0 0.0
  %152 = vmatpush.xpose.msra.mxu0 %v45
  %153 = vmatmul.f32.gmra.mxu0 %v26
  %v154 = vpop.f32.mrf.mxu0
  %v155 = vadd.f32 %v135, %v154
  %156 = vdwg.mxu0
  %157 = vmatpush.xpose.msra.mxu0 0.0
  %158 = vmatpush.xpose.msra.mxu0 0.0
  %159 = vmatpush.xpose.msra.mxu0 0.0
  %160 = vmatpush.xpose.msra.mxu0 0.0
  %161 = vmatpush.xpose.msra.mxu0 0.0
  %162 = vmatpush.xpose.msra.mxu0 0.0
  %163 = vmatpush.xpose.msra.mxu0 0.0
  %164 = vmatpush.xpose.msra.mxu0 0.0
  %165 = vmatpush.xpose.msra.mxu0 0.0
  %166 = vmatpush.xpose.msra.mxu0 0.0
  %167 = vmatpush.xpose.msra.mxu0 0.0
  %168 = vmatpush.xpose.msra.mxu0 0.0
  %169 = vmatpush.xpose.msra.mxu0 0.0
  %170 = vmatpush.xpose.msra.mxu0 0.0
  %171 = vmatpush.xpose.msra.mxu0 0.0
  %172 = vmatpush.xpose.msra.mxu0 %v46
  %173 = vmatmul.f32.gmra.mxu0 %v27
  %v174 = vpop.f32.mrf.mxu0
  %v175 = vadd.f32 %v155, %v174
  %176 = vdwg.mxu0
  %177 = vmatpush.xpose.msra.mxu0 0.0
  %178 = vmatpush.xpose.msra.mxu0 0.0
  %179 = vmatpush.xpose.msra.mxu0 0.0
  %180 = vmatpush.xpose.msra.mxu0 0.0
  %181 = vmatpush.xpose.msra.mxu0 0.0
  %182 = vmatpush.xpose.msra.mxu0 0.0
  %183 = vmatpush.xpose.msra.mxu0 0.0
  %184 = vmatpush.xpose.msra.mxu0 0.0
  %185 = vmatpush.xpose.msra.mxu0 0.0
  %186 = vmatpush.xpose.msra.mxu0 0.0
  %187 = vmatpush.xpose.msra.mxu0 0.0
  %188 = vmatpush.xpose.msra.mxu0 0.0
  %189 = vmatpush.xpose.msra.mxu0 0.0
  %190 = vmatpush.xpose.msra.mxu0 0.0
  %191 = vmatpush.xpose.msra.mxu0 0.0
  %192 = vmatpush.xpose.msra.mxu0 %v47
  %193 = vmatmul.f32.gmra.mxu0 %v28
  %v194 = vpop.f32.mrf.mxu0
  %v195 = vadd.f32 %v175, %v194
  %196 = vdwg.mxu0
  %197 = vmatpush.xpose.msra.mxu0 0.0
  %198 = vmatpush.xpose.msra.mxu0 0.0
  %199 = vmatpush.xpose.msra.mxu0 0.0
  %200 = vmatpush.xpose.msra.mxu0 0.0
  %201 = vmatpush.xpose.msra.mxu0 0.0
  %202 = vmatpush.xpose.msra.mxu0 0.0
  %203 = vmatpush.xpose.msra.mxu0 0.0
  %204 = vmatpush.xpose.msra.mxu0 0.0
  %205 = vmatpush.xpose.msra.mxu0 0.0
  %206 = vmatpush.xpose.msra.mxu0 0.0
  %207 = vmatpush.xpose.msra.mxu0 0.0
  %208 = vmatpush.xpose.msra.mxu0 0.0
  %209 = vmatpush.xpose.msra.mxu0 0.0
  %210 = vmatpush.xpose.msra.mxu0 0.0
  %211 = vmatpush.xpose.msra.mxu0 0.0
  %212 = vmatpush.xpose.msra.mxu0 %v48
  %213 = vmatmul.f32.gmra.mxu0 %v29
  %v214 = vpop.f32.mrf.mxu0
  %v215 = vadd.f32 %v195, %v214
  %216 = vdwg.mxu0
  %vm217 = vcmask 9216
  %218 = vst.msk [vmem:[%s2] sm:$0x3] %vm217, %v215
  %221 = vst [vmem:[#allocation1] ss:$4 sm:$0xff] %v15
  %s222 = scalar_lea.vmem [#allocation1], 32
  %223 = vst [vmem:[%s222] ss:$4 sm:$0xff] %v16
  %v224 = vld.sshfl [vmem:[#allocation1] sm:$0xff pattern:$0x73625140]
  %v225 = vld.sshfl [vmem:[#allocation1 + $0x8] sm:$0xff pattern:$0x73625140]
  %v226 = vld.sshfl [vmem:[#allocation1 + $0x10] sm:$0xff pattern:$0x73625140]
  %v227 = vld.sshfl [vmem:[#allocation1 + $0x18] sm:$0xff pattern:$0x73625140]
  %v228 = vld.sshfl [vmem:[#allocation1 + $0x20] sm:$0xff pattern:$0x73625140]
  %v229 = vld.sshfl [vmem:[#allocation1 + $0x28] sm:$0xff pattern:$0x73625140]
  %v230 = vld.sshfl [vmem:[#allocation1 + $0x30] sm:$0xff pattern:$0x73625140]
  %v231 = vld.sshfl [vmem:[#allocation1 + $0x38] sm:$0xff pattern:$0x73625140]
  %240 = vst [vmem:[#allocation1] ss:$4 sm:$0xff] %v15
  %s241 = scalar_lea.vmem [#allocation1], 32
  %242 = vst [vmem:[%s241] ss:$4 sm:$0xff] %v16
  %v243 = vld.sshfl [vmem:[#allocation1] sm:$0xff pattern:$0x73625140]
  %v244 = vld.sshfl [vmem:[#allocation1 + $0x8] sm:$0xff pattern:$0x73625140]
  %v245 = vld.sshfl [vmem:[#allocation1 + $0x10] sm:$0xff pattern:$0x73625140]
  %v246 = vld.sshfl [vmem:[#allocation1 + $0x18] sm:$0xff pattern:$0x73625140]
  %v247 = vld.sshfl [vmem:[#allocation1 + $0x20] sm:$0xff pattern:$0x73625140]
  %v248 = vld.sshfl [vmem:[#allocation1 + $0x28] sm:$0xff pattern:$0x73625140]
  %v249 = vld.sshfl [vmem:[#allocation1 + $0x30] sm:$0xff pattern:$0x73625140]
  %v250 = vld.sshfl [vmem:[#allocation1 + $0x38] sm:$0xff pattern:$0x73625140]
  %259 = vmatpush.xpose.msra.mxu0 0.0
  %260 = vmatpush.xpose.msra.mxu0 0.0
  %261 = vmatpush.xpose.msra.mxu0 0.0
  %262 = vmatpush.xpose.msra.mxu0 0.0
  %263 = vmatpush.xpose.msra.mxu0 0.0
  %264 = vmatpush.xpose.msra.mxu0 0.0
  %265 = vmatpush.xpose.msra.mxu0 0.0
  %266 = vmatpush.xpose.msra.mxu0 0.0
  %267 = vmatpush.xpose.msra.mxu0 0.0
  %268 = vmatpush.xpose.msra.mxu0 0.0
  %269 = vmatpush.xpose.msra.mxu0 0.0
  %270 = vmatpush.xpose.msra.mxu0 0.0
  %271 = vmatpush.xpose.msra.mxu0 0.0
  %272 = vmatpush.xpose.msra.mxu0 0.0
  %273 = vmatpush.xpose.msra.mxu0 0.0
  %274 = vmatpush.xpose.msra.mxu0 %v243
  %275 = vmatmul.f32.gmra.mxu0 %v224
  %v276 = vpop.f32.mrf.mxu0
  %v277 = vadd.f32 0.0, %v276
  %278 = vdwg.mxu0
  %279 = vmatpush.xpose.msra.mxu0 0.0
  %280 = vmatpush.xpose.msra.mxu0 0.0
  %281 = vmatpush.xpose.msra.mxu0 0.0
  %282 = vmatpush.xpose.msra.mxu0 0.0
  %283 = vmatpush.xpose.msra.mxu0 0.0
  %284 = vmatpush.xpose.msra.mxu0 0.0
  %285 = vmatpush.xpose.msra.mxu0 0.0
  %286 = vmatpush.xpose.msra.mxu0 0.0
  %287 = vmatpush.xpose.msra.mxu0 0.0
  %288 = vmatpush.xpose.msra.mxu0 0.0
  %289 = vmatpush.xpose.msra.mxu0 0.0
  %290 = vmatpush.xpose.msra.mxu0 0.0
  %291 = vmatpush.xpose.msra.mxu0 0.0
  %292 = vmatpush.xpose.msra.mxu0 0.0
  %293 = vmatpush.xpose.msra.mxu0 0.0
  %294 = vmatpush.xpose.msra.mxu0 %v244
  %295 = vmatmul.f32.gmra.mxu0 %v225
  %v296 = vpop.f32.mrf.mxu0
  %v297 = vadd.f32 %v277, %v296
  %298 = vdwg.mxu0
  %299 = vmatpush.xpose.msra.mxu0 0.0
  %300 = vmatpush.xpose.msra.mxu0 0.0
  %301 = vmatpush.xpose.msra.mxu0 0.0
  %302 = vmatpush.xpose.msra.mxu0 0.0
  %303 = vmatpush.xpose.msra.mxu0 0.0
  %304 = vmatpush.xpose.msra.mxu0 0.0
  %305 = vmatpush.xpose.msra.mxu0 0.0
  %306 = vmatpush.xpose.msra.mxu0 0.0
  %307 = vmatpush.xpose.msra.mxu0 0.0
  %308 = vmatpush.xpose.msra.mxu0 0.0
  %309 = vmatpush.xpose.msra.mxu0 0.0
  %310 = vmatpush.xpose.msra.mxu0 0.0
  %311 = vmatpush.xpose.msra.mxu0 0.0
  %312 = vmatpush.xpose.msra.mxu0 0.0
  %313 = vmatpush.xpose.msra.mxu0 0.0
  %314 = vmatpush.xpose.msra.mxu0 %v245
  %315 = vmatmul.f32.gmra.mxu0 %v226
  %v316 = vpop.f32.mrf.mxu0
  %v317 = vadd.f32 %v297, %v316
  %318 = vdwg.mxu0
  %319 = vmatpush.xpose.msra.mxu0 0.0
  %320 = vmatpush.xpose.msra.mxu0 0.0
  %321 = vmatpush.xpose.msra.mxu0 0.0
  %322 = vmatpush.xpose.msra.mxu0 0.0
  %323 = vmatpush.xpose.msra.mxu0 0.0
  %324 = vmatpush.xpose.msra.mxu0 0.0
  %325 = vmatpush.xpose.msra.mxu0 0.0
  %326 = vmatpush.xpose.msra.mxu0 0.0
  %327 = vmatpush.xpose.msra.mxu0 0.0
  %328 = vmatpush.xpose.msra.mxu0 0.0
  %329 = vmatpush.xpose.msra.mxu0 0.0
  %330 = vmatpush.xpose.msra.mxu0 0.0
  %331 = vmatpush.xpose.msra.mxu0 0.0
  %332 = vmatpush.xpose.msra.mxu0 0.0
  %333 = vmatpush.xpose.msra.mxu0 0.0
  %334 = vmatpush.xpose.msra.mxu0 %v246
  %335 = vmatmul.f32.gmra.mxu0 %v227
  %v336 = vpop.f32.mrf.mxu0
  %v337 = vadd.f32 %v317, %v336
  %338 = vdwg.mxu0
  %339 = vmatpush.xpose.msra.mxu0 0.0
  %340 = vmatpush.xpose.msra.mxu0 0.0
  %341 = vmatpush.xpose.msra.mxu0 0.0
  %342 = vmatpush.xpose.msra.mxu0 0.0
  %343 = vmatpush.xpose.msra.mxu0 0.0
  %344 = vmatpush.xpose.msra.mxu0 0.0
  %345 = vmatpush.xpose.msra.mxu0 0.0
  %346 = vmatpush.xpose.msra.mxu0 0.0
  %347 = vmatpush.xpose.msra.mxu0 0.0
  %348 = vmatpush.xpose.msra.mxu0 0.0
  %349 = vmatpush.xpose.msra.mxu0 0.0
  %350 = vmatpush.xpose.msra.mxu0 0.0
  %351 = vmatpush.xpose.msra.mxu0 0.0
  %352 = vmatpush.xpose.msra.mxu0 0.0
  %353 = vmatpush.xpose.msra.mxu0 0.0
  %354 = vmatpush.xpose.msra.mxu0 %v247
  %355 = vmatmul.f32.gmra.mxu0 %v228
  %v356 = vpop.f32.mrf.mxu0
  %v357 = vadd.f32 %v337, %v356
  %358 = vdwg.mxu0
  %359 = vmatpush.xpose.msra.mxu0 0.0
  %360 = vmatpush.xpose.msra.mxu0 0.0
  %361 = vmatpush.xpose.msra.mxu0 0.0
  %362 = vmatpush.xpose.msra.mxu0 0.0
  %363 = vmatpush.xpose.msra.mxu0 0.0
  %364 = vmatpush.xpose.msra.mxu0 0.0
  %365 = vmatpush.xpose.msra.mxu0 0.0
  %366 = vmatpush.xpose.msra.mxu0 0.0
  %367 = vmatpush.xpose.msra.mxu0 0.0
  %368 = vmatpush.xpose.msra.mxu0 0.0
  %369 = vmatpush.xpose.msra.mxu0 0.0
  %370 = vmatpush.xpose.msra.mxu0 0.0
  %371 = vmatpush.xpose.msra.mxu0 0.0
  %372 = vmatpush.xpose.msra.mxu0 0.0
  %373 = vmatpush.xpose.msra.mxu0 0.0
  %374 = vmatpush.xpose.msra.mxu0 %v248
  %375 = vmatmul.f32.gmra.mxu0 %v229
  %v376 = vpop.f32.mrf.mxu0
  %v377 = vadd.f32 %v357, %v376
  %378 = vdwg.mxu0
  %379 = vmatpush.xpose.msra.mxu0 0.0
  %380 = vmatpush.xpose.msra.mxu0 0.0
  %381 = vmatpush.xpose.msra.mxu0 0.0
  %382 = vmatpush.xpose.msra.mxu0 0.0
  %383 = vmatpush.xpose.msra.mxu0 0.0
  %384 = vmatpush.xpose.msra.mxu0 0.0
  %385 = vmatpush.xpose.msra.mxu0 0.0
  %386 = vmatpush.xpose.msra.mxu0 0.0
  %387 = vmatpush.xpose.msra.mxu0 0.0
  %388 = vmatpush.xpose.msra.mxu0 0.0
  %389 = vmatpush.xpose.msra.mxu0 0.0
  %390 = vmatpush.xpose.msra.mxu0 0.0
  %391 = vmatpush.xpose.msra.mxu0 0.0
  %392 = vmatpush.xpose.msra.mxu0 0.0
  %393 = vmatpush.xpose.msra.mxu0 0.0
  %394 = vmatpush.xpose.msra.mxu0 %v249
  %395 = vmatmul.f32.gmra.mxu0 %v230
  %v396 = vpop.f32.mrf.mxu0
  %v397 = vadd.f32 %v377, %v396
  %398 = vdwg.mxu0
  %399 = vmatpush.xpose.msra.mxu0 0.0
  %400 = vmatpush.xpose.msra.mxu0 0.0
  %401 = vmatpush.xpose.msra.mxu0 0.0
  %402 = vmatpush.xpose.msra.mxu0 0.0
  %403 = vmatpush.xpose.msra.mxu0 0.0
  %404 = vmatpush.xpose.msra.mxu0 0.0
  %405 = vmatpush.xpose.msra.mxu0 0.0
  %406 = vmatpush.xpose.msra.mxu0 0.0
  %407 = vmatpush.xpose.msra.mxu0 0.0
  %408 = vmatpush.xpose.msra.mxu0 0.0
  %409 = vmatpush.xpose.msra.mxu0 0.0
  %410 = vmatpush.xpose.msra.mxu0 0.0
  %411 = vmatpush.xpose.msra.mxu0 0.0
  %412 = vmatpush.xpose.msra.mxu0 0.0
  %413 = vmatpush.xpose.msra.mxu0 0.0
  %414 = vmatpush.xpose.msra.mxu0 %v250
  %415 = vmatmul.f32.gmra.mxu0 %v231
  %v416 = vpop.f32.mrf.mxu0
  %v417 = vadd.f32 %v397, %v416
  %418 = vdwg.mxu0
  %419 = vst.msk [vmem:[%s3] sm:$0x3] %vm217, %v417
  // Predicated region
  $region10: #{orthogo_diff_loss.1} parent=0 // pred_check
    _
  $region11: #{orthogo_diff_loss.1} parent=0 // pred_check_branch
    %421 = sbr.rel (0) target = $region13
  $region12: #{orthogo_diff_loss.1} parent=0 // pred_region
    _
  $region13: #{orthogo_diff_loss.1} parent=0 // pred_fallthru
    _
  // Predicated region
  $region14: #{orthogo_diff_loss.1} parent=0 // pred_check
    _
  $region15: #{orthogo_diff_loss.1} parent=0 // pred_check_branch
    %423 = sbr.rel (0) target = $region17
  $region16: #{orthogo_diff_loss.1} parent=0 // pred_region
    _
  $region17: #{orthogo_diff_loss.1} parent=0 // pred_fallthru
    _
  // Predicated region
  $region18: #{orthogo_diff_loss.1} parent=0 // pred_check
    _
  $region19: #{orthogo_diff_loss.1} parent=0 // pred_check_branch
    %425 = sbr.rel (0) target = $region21
  $region20: #{orthogo_diff_loss.1} parent=0 // pred_region
    _
  $region21: #{orthogo_diff_loss.1} parent=0 // pred_fallthru
    _
  // Predicated region
  $region22: #{orthogo_diff_loss.1} parent=0 // pred_check
    _
  $region23: #{orthogo_diff_loss.1} parent=0 // pred_check_branch
    %427 = sbr.rel (0) target = $region25
  $region24: #{orthogo_diff_loss.1} parent=0 // pred_region
    _
  $region25: #{orthogo_diff_loss.1} parent=0 // pred_fallthru
    _

</llo_original>
